<compile_context>
chip_gen: v6e
topology: v6e:2x2x1
jax: 0.10.0
libtpu: 0.0.40
codegen_flags: <defaults>
</compile_context>

<pallas_src>
import functools
import math

import jax
import jax.numpy as jnp
from jax.experimental import pallas as pl
from jax.experimental.pallas import tpu as pltpu


def _primarycaps_kernel(x_ref, w_ref, b_ref, o_ref, *, bp2, chunk, lhs_transposed):
    """x_ref: (bn, A, T) [fast path] or (bn, T, Cin) [im2col path];
    w_ref: (Cin, Cout) bf16 resident; b_ref: (1, Cout); o_ref: (bn, T, Cout)."""
    bn, T, _cout = o_ref.shape
    nchunks = T // chunk
    w = w_ref[...]
    b = b_ref[...].astype(jnp.float32)

    def do_chunk(n, r0):
        if lhs_transposed:
            xc = x_ref[n, :, pl.ds(r0, chunk)].astype(jnp.bfloat16)   # (Cin, chunk)
            dn = (((0,), (0,)), ((), ()))
        else:
            xc = x_ref[n, pl.ds(r0, chunk), :].astype(jnp.bfloat16)   # (chunk, Cin)
            dn = (((1,), (0,)), ((), ()))
        y = jax.lax.dot_general(xc, w, dimension_numbers=dn,
                                preferred_element_type=jnp.float32) + b
        # Pose columns pass through; sigmoid only on the trailing B activation
        # columns (two static-sliced stores -> no iota/where, no extra EUP work).
        o_ref[n, pl.ds(r0, chunk), :bp2] = y[:, :bp2].astype(o_ref.dtype)
        o_ref[n, pl.ds(r0, chunk), bp2:] = jax.nn.sigmoid(y[:, bp2:]).astype(o_ref.dtype)

    for n in range(bn):                       # static unroll over images in block
        if nchunks == 1:
            do_chunk(n, 0)
        else:
            def body(c, carry):
                do_chunk(n, pl.multiple_of(c * chunk, chunk))
                return carry
            jax.lax.fori_loop(0, nchunks, body, 0, unroll=(nchunks <= 4))


def _im2col_nhwc(x, K, stride):
    """x: (N, C, H, W) -> patches (N, oh, ow, C*K*K), column order (c, kh, kw)."""
    N, C, H, W = x.shape
    oh = (H - K) // stride + 1
    ow = (W - K) // stride + 1
    x_nhwc = jnp.transpose(x, (0, 2, 3, 1))                  # (N, H, W, C)
    cols = []
    for kh in range(K):
        for kw in range(K):
            cols.append(x_nhwc[:, kh:kh + (oh - 1) * stride + 1:stride,
                                  kw:kw + (ow - 1) * stride + 1:stride, :])
    patches = jnp.stack(cols, axis=-1)                       # (N, oh, ow, C, K*K)
    return patches.reshape(N, oh, ow, C * K * K)


def _vmem_capacity_bytes():
    try:
        info = pltpu.get_tpu_info()
        for name in ("vmem_capacity_bytes", "vmem_bytes", "vmem_size_bytes"):
            v = getattr(info, name, None)
            if v:
                return int(v)
    except Exception:
        pass
    return 64 * 2**20            # conservative (v7x-class) if the query fails


def _row_chunk(T):
    """Rows per in-kernel dot: keeps the f32 result (<=256 x Cout) vreg-resident."""
    for c in (256, 128):
        if T % c == 0:
            return c
    return T


def _choose_tiles(N, S, lhs_row_bytes, cout, budget_bytes, min_steps):
    """Pick (bn, T): batch images and spatial rows per block, with NO padding.

    T is a multiple-of-128 divisor of S (or S itself) and bn a divisor of N, so
    the grid tiles the arrays exactly; blocks grow until the per-step streaming
    VMEM (double-buffered in + out) hits budget, while keeping >= min_steps grid
    steps (pipelining / v7x dual-TensorCore load balance)."""
    per_row = 2 * lhs_row_bytes + 2 * cout * 2      # dbl-buffered LHS + bf16 out
    if S % 128 == 0:
        cands = sorted({t for t in range(128, S + 1, 128) if S % t == 0},
                       reverse=True)
    else:
        cands = [S]
    fits = [t for t in cands if t * per_row <= budget_bytes] or [cands[-1]]
    T = next((t for t in fits if N * (S // t) >= min_steps), fits[0])
    bn = 1
    for d in range(2, N + 1):
        if N % d:
            continue
        if d * T * per_row <= budget_bytes and (N // d) * (S // T) >= min_steps:
            bn = d
    return bn, T


def primary_caps_forward(x, w_pose, b_pose, w_a, b_a, *, K, stride, P,
                         io_dtype=jnp.bfloat16, out_dtype=jnp.bfloat16):
    """x: (N, A, H, W) NCHW like PyTorch.  Returns (N, h', w', B*(P*P+1))."""
    N, A, H, W = x.shape
    BP2 = w_pose.shape[0]                   # B * P * P
    B = w_a.shape[0]
    Cin = A * K * K
    Cout = BP2 + B
    oh = (H - K) // stride + 1
    ow = (W - K) // stride + 1
    S = oh * ow

    # Fused weight matrix (Cin, Cout) + bias (1, Cout).  Cout stays UNPADDED.
    W_full = jnp.concatenate(
        [w_pose.reshape(BP2, Cin), w_a.reshape(B, Cin)], axis=0
    ).T.astype(io_dtype)
    bias_full = jnp.concatenate([b_pose, b_a]).reshape(1, Cout).astype(io_dtype)

    if K == 1:
        # Fast path: no host transpose / cast / pad.  A stays on sublanes,
        # spatial on lanes; the kernel contracts A (transposed-LHS matmul).
        xs = x if stride == 1 else x[:, :, ::stride, ::stride]
        lhs = xs.reshape(N, A, S)                              # free, contiguous
        lhs_transposed = True
        lhs_row_bytes = A * jnp.dtype(xs.dtype).itemsize
    else:
        # TODO(synk): fuse the K*K tap gather into the kernel (extra "arbitrary"
        # grid axis striding into raw NHWC input + f32 accumulator) instead of
        # materializing the K*K-duplicated patch matrix host-side.
        lhs = _im2col_nhwc(x.astype(io_dtype), K, stride).reshape(N, S, Cin)
        lhs_transposed = False
        lhs_row_bytes = Cin * jnp.dtype(io_dtype).itemsize

    # Generation-aware VMEM budget: v7x has 64 MiB physical VMEM (vs 128 MiB on
    # v5e/v6e) and two TensorCores that want several grid steps to share.
    vmem_cap = _vmem_capacity_bytes()
    if vmem_cap <= 64 * 2**20:
        tile_budget, vmem_ceiling, min_steps = 20 * 2**20, 40 * 2**20, 8
    else:
        tile_budget, vmem_ceiling, min_steps = 40 * 2**20, 80 * 2**20, 2

    bn, T = _choose_tiles(N, S, lhs_row_bytes, Cout, tile_budget, min_steps)
    chunk = _row_chunk(T)

    if lhs_transposed:
        lhs_spec = pl.BlockSpec((bn, A, T), lambda i, j: (i, 0, j))
    else:
        lhs_spec = pl.BlockSpec((bn, T, Cin), lambda i, j: (i, j, 0))

    est_vmem = (2 * bn * T * lhs_row_bytes          # double-buffered LHS blocks
                + 2 * bn * T * Cout * 2             # double-buffered output blocks
                + chunk * Cout * 4                  # in-kernel f32 chunk temp
                + 2 * Cin * Cout * 2                # resident fused weights
                + 2 * Cout * 2)                     # resident bias
    vmem_limit = int(min(vmem_ceiling, max(16 * 2**20, 2 * est_vmem)))

    out = pl.pallas_call(
        functools.partial(_primarycaps_kernel, bp2=BP2, chunk=chunk,
                          lhs_transposed=lhs_transposed),
        out_shape=jax.ShapeDtypeStruct((N, S, Cout), out_dtype),
        grid_spec=pltpu.PrefetchScalarGridSpec(
            num_scalar_prefetch=0,
            grid=(N // bn, S // T),
            in_specs=[
                lhs_spec,                                        # streamed input
                pl.BlockSpec((Cin, Cout), lambda i, j: (0, 0)),  # resident weights
                pl.BlockSpec((1, Cout), lambda i, j: (0, 0)),    # resident bias
            ],
            out_specs=pl.BlockSpec((bn, T, Cout), lambda i, j: (i, j, 0)),
        ),
        compiler_params=pltpu.CompilerParams(
            dimension_semantics=("parallel", "parallel"),
            vmem_limit_bytes=vmem_limit,
        ),
    )(lhs, W_full, bias_full)

    # (N, S, Cout) is contiguous, so the NHWC reshape is free metadata (no copy).
    return out.reshape(N, oh, ow, Cout)


def _init_conv_params(key, out_ch, in_ch, K):
    """Deterministic init mimicking nn.Conv2d defaults (uniform +-1/sqrt(fan_in))."""
    kw, kb = jax.random.split(key)
    fan_in = in_ch * K * K
    bound = 1.0 / math.sqrt(fan_in)
    w = jax.random.uniform(kw, (out_ch, in_ch, K, K), jnp.float32, -bound, bound)
    b = jax.random.uniform(kb, (out_ch,), jnp.float32, -bound, bound)
    return w, b


if __name__ == "__main__":
    # small shapes consistent with the module: A in-channels, B capsule types, P pose
    N, A, Hh, Ww = 2, 8, 16, 16
    B, P, K, stride = 4, 4, 1, 1
    BP2 = B * P * P

    key = jax.random.PRNGKey(0)
    kx, kp, ka = jax.random.split(key, 3)
    x = jax.random.normal(kx, (N, A, Hh, Ww), jnp.float32)

    w_pose, b_pose = _init_conv_params(kp, BP2, A, K)
    w_a, b_a = _init_conv_params(ka, B, A, K)

    out = primary_caps_forward(x, w_pose, b_pose, w_a, b_a, K=K, stride=stride, P=P)
    out = jax.block_until_ready(out)

    # pure-JAX reference with the same bf16 rounding of x / weights, f32 math
    def bf(a):
        return a.astype(jnp.bfloat16).astype(jnp.float32)

    oh = (Hh - K) // stride + 1
    ow = (Ww - K) // stride + 1
    patches = _im2col_nhwc(bf(x), K, stride).reshape(-1, A * K * K)
    p_ref = patches @ bf(w_pose).reshape(BP2, -1).T + bf(b_pose)
    a_ref = jax.nn.sigmoid(patches @ bf(w_a).reshape(B, -1).T + bf(b_a))
    ref = jnp.concatenate([p_ref, a_ref], axis=-1).reshape(N, oh, ow, BP2 + B)

    assert out.shape == (N, Hh, Ww, B * (P * P + 1)), out.shape
    err = float(jnp.max(jnp.abs(out.astype(jnp.float32) - ref)))
    assert jnp.allclose(out.astype(jnp.float32), ref, atol=2e-2, rtol=2e-2), err
    print("KERNEL_OK")
</pallas_src>

<mosaic_0001>
module attributes {stable_mosaic.version = 11 : i64} {
  func.func @_primarycaps_kernel(%arg0: i32, %arg1: i32, %arg2: memref<1x8x256xf32, #tpu.memory_space<vmem>>, %arg3: memref<8x68xbf16, #tpu.memory_space<vmem>>, %arg4: memref<1x68xbf16, #tpu.memory_space<vmem>>, %arg5: memref<1x256x68xbf16, #tpu.memory_space<vmem>>) attributes {dimension_semantics = [#tpu.dimension_semantics<parallel>, #tpu.dimension_semantics<parallel>], iteration_bounds = array<i64: 2, 1>, scalar_prefetch = 0 : i64, scratch_operands = 0 : i64, tpu.core_type = #tpu.core_type<tc>, window_params = [{transform_indices = @transform_0, window_bounds = array<i64: 1, 8, 256>}, {pipeline_mode = #tpu.pipeline_mode<synchronous>, transform_indices = @transform_1, window_bounds = array<i64: 8, 68>}, {pipeline_mode = #tpu.pipeline_mode<synchronous>, transform_indices = @transform_2, window_bounds = array<i64: 1, 68>}, {transform_indices = @transform_3, window_bounds = array<i64: 1, 256, 68>}]} {
    %c0 = arith.constant 0 : index
    %c0_0 = arith.constant 0 : index
    %0 = vector.load %arg3[%c0, %c0_0] : memref<8x68xbf16, #tpu.memory_space<vmem>>, vector<8x68xbf16>
    %c0_1 = arith.constant 0 : index
    %c0_2 = arith.constant 0 : index
    %1 = vector.load %arg4[%c0_1, %c0_2] : memref<1x68xbf16, #tpu.memory_space<vmem>>, vector<1x68xbf16>
    %2 = arith.extf %1 : vector<1x68xbf16> to vector<1x68xf32>
    %c0_3 = arith.constant 0 : index
    %c0_4 = arith.constant 0 : index
    %c0_5 = arith.constant 0 : index
    %3 = vector.load %arg2[%c0_3, %c0_4, %c0_5] : memref<1x8x256xf32, #tpu.memory_space<vmem>>, vector<1x8x256xf32>
    %4 = vector.shape_cast %3 : vector<1x8x256xf32> to vector<8x256xf32>
    %5 = arith.truncf %4 : vector<8x256xf32> to vector<8x256xbf16>
    %cst = arith.constant dense<0.000000e+00> : vector<256x68xf32>
    %6 = tpu.matmul %5, %0, %cst {dimension_numbers = #tpu.dot_dimension_numbers<[0], [0], [1], [1], [0, 1, 1, 1], [], []>} : vector<8x256xbf16>, vector<8x68xbf16>, vector<256x68xf32> -> vector<256x68xf32>
    %7 = vector.broadcast %2 : vector<1x68xf32> to vector<256x68xf32>
    %8 = arith.addf %6, %7 : vector<256x68xf32>
    %9 = vector.extract_strided_slice %8 {offsets = [0, 0], sizes = [256, 64], strides = [1, 1]} : vector<256x68xf32> to vector<256x64xf32>
    %10 = arith.truncf %9 : vector<256x64xf32> to vector<256x64xbf16>
    %c0_6 = arith.constant 0 : index
    %c0_7 = arith.constant 0 : index
    %c0_8 = arith.constant 0 : index
    %11 = vector.load %arg5[%c0_6, %c0_7, %c0_8] : memref<1x256x68xbf16, #tpu.memory_space<vmem>>, vector<1x256x64xbf16>
    %12 = vector.shape_cast %11 : vector<1x256x64xbf16> to vector<256x64xbf16>
    %13 = vector.shape_cast %10 : vector<256x64xbf16> to vector<1x256x64xbf16>
    tpu.vector_store %arg5[%c0_6, %c0_7, %c0_8], %13 {strides = array<i32>} : memref<1x256x68xbf16, #tpu.memory_space<vmem>>, vector<1x256x64xbf16>,
    %14 = vector.extract_strided_slice %8 {offsets = [0, 64], sizes = [256, 4], strides = [1, 1]} : vector<256x68xf32> to vector<256x4xf32>
    %15 = arith.negf %14 : vector<256x4xf32>
    %16 = math.exp %15 : vector<256x4xf32>
    %cst_9 = arith.constant 1.000000e+00 : f32
    %17 = vector.broadcast %cst_9 : f32 to vector<256x4xf32>
    %18 = arith.addf %17, %16 : vector<256x4xf32>
    %19 = arith.divf %17, %18 : vector<256x4xf32>
    %20 = arith.truncf %19 : vector<256x4xf32> to vector<256x4xbf16>
    %c0_10 = arith.constant 0 : index
    %c0_11 = arith.constant 0 : index
    %c64 = arith.constant 64 : index
    %21 = vector.load %arg5[%c0_10, %c0_11, %c64] : memref<1x256x68xbf16, #tpu.memory_space<vmem>>, vector<1x256x4xbf16>
    %22 = vector.shape_cast %21 : vector<1x256x4xbf16> to vector<256x4xbf16>
    %23 = vector.shape_cast %20 : vector<256x4xbf16> to vector<1x256x4xbf16>
    tpu.vector_store %arg5[%c0_10, %c0_11, %c64], %23 {strides = array<i32>} : memref<1x256x68xbf16, #tpu.memory_space<vmem>>, vector<1x256x4xbf16>,
    return
  }
  func.func @transform_0(%arg0: i32, %arg1: i32) -> (i32, i32, i32) {
    %c0_i32 = arith.constant 0 : i32
    %c0_i32_0 = arith.constant 0 : i32
    return %arg0, %c0_i32, %arg1 : i32, i32, i32
  }
  func.func @transform_1(%arg0: i32, %arg1: i32) -> (i32, i32) {
    %c0_i32 = arith.constant 0 : i32
    %c0_i32_0 = arith.constant 0 : i32
    %c0_i32_1 = arith.constant 0 : i32
    return %c0_i32, %c0_i32_0 : i32, i32
  }
  func.func @transform_2(%arg0: i32, %arg1: i32) -> (i32, i32) {
    %c0_i32 = arith.constant 0 : i32
    %c0_i32_0 = arith.constant 0 : i32
    %c0_i32_1 = arith.constant 0 : i32
    return %c0_i32, %c0_i32_0 : i32, i32
  }
  func.func @transform_3(%arg0: i32, %arg1: i32) -> (i32, i32, i32) {
    %c0_i32 = arith.constant 0 : i32
    %c0_i32_0 = arith.constant 0 : i32
    return %arg0, %arg1, %c0_i32 : i32, i32, i32
  }
}

</mosaic_0001>

<llo_original>
// kernel: tpu_custom_call.1
$region0: #{tpu_custom_call.1}
  #allocation0 [shape = 'u32[]', space=smem, size = 0x4, offset = 0x4, fixed_abs, tag = 'smem constant byte address 0x4 - core index']
  #allocation1 [shape = 'u32[144,128]{1,0:T(1,128)}', space=vmem, size = 0x12000, scoped, tag = 'internal scratch']
  %s0 = inlined_call_operand.hbm [shape: f32[2,8,256], index: 0, kind: input, shape index: {}]
  %s1 = inlined_call_operand.hbm [shape: bf16[8,68], index: 1, kind: input, shape index: {}]
  %s2 = inlined_call_operand.vmem [shape: bf16[1,68], index: 2, kind: input, shape index: {}]
  %s3 = inlined_call_operand.vmem [shape: bf16[2,256,68], index: 3, kind: output, shape index: {}]
  %s4 = sld [smem:[#allocation0]]
  $region53: #{tpu_custom_call.1} parent=0
    _
  %s6 = ssub.s32 1, %s4
  %s7 = scalar_select 0, %s6, %s4
  $region1: #{tpu_custom_call.1} parent=0
    #allocation2 [shape = 'u8[16384]{0}', space=vmem, size = 0x4000, scoped, tag = 'input window, operand 0']
    #allocation3 [shape = 's32[2]{0}', space=sflag, size = 0x8, scoped, tag = 'scoped memory for tpu_custom_call.1']
    #allocation4 [shape = 'u8[2048]{0}', space=vmem, size = 0x800, scoped, tag = 'input window, operand 1, single buffered']
    #allocation5 [shape = 's32[1]{0}', space=sflag, size = 0x4, scoped, tag = 'scoped memory for tpu_custom_call.1']
    %8 = vsyncpa [#allocation3], 0
    %s9 = scalar_lea.sflag [#allocation3], 1
    %10 = vsyncpa %s9, 0
    %11 = vsyncpa [#allocation5], 0
    loop: start=0, step=1, limit=4
    $region2: #{tpu_custom_call.1} parent=1 // loop_pre_header
      _
    $region3: #{tpu_custom_call.1} parent=1 // loop_header
      %s13 = sphi 0, %s17
      %p14 = scmp.ge.s32.totalorder %s13, 4
      %s20 = sphi 0, %s32
      %s21 = sphi 0, %s28
      %s22 = sphi 0, %s20
      %s23 = sphi 0, %s21
      %s24 = sphi 0, %s22
      %s25 = sphi 0, %s23
      %s37 = sphi 0, %s39
      %s40 = sphi 0, %s37
      %s41 = sphi 0, %s40
      %s57 = sphi 0, %s41
      %s61 = sphi 0, %s61
      %s63 = sphi 0, %s61
      %s64 = sphi 0, %s63
      %s78 = sphi 0, %s64
      %s82 = sphi 0, %s82
      %s84 = sphi 0, %s82
      %s85 = sphi 0, %s84
      %s99 = sphi 0, %s85
      %s107 = sphi 0, %s109
      %s110 = sphi 0, %s107
      %s111 = sphi 0, %s110
      %s127 = sphi 0, %s111
    $region4: #{tpu_custom_call.1} parent=1 // loop_header_branch
      %16 = sbr.rel (%p14) target = $region8
    $region5: #{tpu_custom_call.1} parent=1 // loop_body
      %s18 = ssub.s32 %s13, 1
      %s19 = ssub.s32 %s13, 2
      %s26 = sadd.s32 1, %s21
      %p27 = scmp.ge.s32.totalorder %s26, 1
      %s28 = scalar_select %p27, 0, %s26
      %s29 = sadd.s32 1, %s20
      %s30 = scalar_select %p27, %s29, %s20
      %p31 = scmp.ge.s32.totalorder %s30, 2
      %s32 = scalar_select %p31, 0, %s30
      %s33 = ssub.s32 %s20, %s32
      %s34 = ssub.s32 %s21, %s28
      %s35 = sor.u32 %s33, %s34
      %p36 = scmp.eq.s32.totalorder %s35, 0
      %s38 = sadd.s32 %s37, 1
      %s39 = scalar_select %p36, %s37, %s38
      %p42 = pneg %p36
      %p43 = scmp.eq.s32.totalorder %s13, 1
      %p44 = por %p42, %p43
      %p45 = scmp.ne.s32.totalorder %s37, %s40
      %p46 = scmp.eq.s32.totalorder %s13, 0
      %p47 = por %p45, %p46
      %p48 = scmp.ne.s32.totalorder %s37, %s40
      %p49 = scmp.eq.s32.totalorder %s18, 1
      %p50 = por %p48, %p49
      %p51 = scmp.ne.s32.totalorder %s40, %s41
      %p52 = scmp.eq.s32.totalorder %s18, 0
      %p53 = por %p51, %p52
      %p54 = scmp.ne.s32.totalorder %s40, %s41
      %p55 = scmp.eq.s32.totalorder %s19, 1
      %p56 = por %p54, %p55
      %p58 = scmp.ne.s32.totalorder %s41, %s57
      %p59 = scmp.eq.s32.totalorder %s19, 0
      %p60 = por %p58, %p59
      %s62 = sadd.s32 %s61, 1
      %p65 = scmp.eq.s32.totalorder %s13, 1
      %p66 = scmp.ne.s32.totalorder %s61, %s63
      %p67 = scmp.eq.s32.totalorder %s13, 0
      %p68 = por %p66, %p67
      %p69 = scmp.ne.s32.totalorder %s61, %s63
      %p70 = scmp.eq.s32.totalorder %s18, 1
      %p71 = por %p69, %p70
      %p72 = scmp.ne.s32.totalorder %s63, %s64
      %p73 = scmp.eq.s32.totalorder %s18, 0
      %p74 = por %p72, %p73
      %p75 = scmp.ne.s32.totalorder %s63, %s64
      %p76 = scmp.eq.s32.totalorder %s19, 1
      %p77 = por %p75, %p76
      %p79 = scmp.ne.s32.totalorder %s64, %s78
      %p80 = scmp.eq.s32.totalorder %s19, 0
      %p81 = por %p79, %p80
      %s83 = sadd.s32 %s82, 1
      %p86 = scmp.eq.s32.totalorder %s13, 1
      %p87 = scmp.ne.s32.totalorder %s82, %s84
      %p88 = scmp.eq.s32.totalorder %s13, 0
      %p89 = por %p87, %p88
      %p90 = scmp.ne.s32.totalorder %s82, %s84
      %p91 = scmp.eq.s32.totalorder %s18, 1
      %p92 = por %p90, %p91
      %p93 = scmp.ne.s32.totalorder %s84, %s85
      %p94 = scmp.eq.s32.totalorder %s18, 0
      %p95 = por %p93, %p94
      %p96 = scmp.ne.s32.totalorder %s84, %s85
      %p97 = scmp.eq.s32.totalorder %s19, 1
      %p98 = por %p96, %p97
      %p100 = scmp.ne.s32.totalorder %s85, %s99
      %p101 = scmp.eq.s32.totalorder %s19, 0
      %p102 = por %p100, %p101
      %s103 = ssub.s32 %s20, %s32
      %s104 = ssub.s32 %s21, %s28
      %s105 = sor.u32 %s103, %s104
      %p106 = scmp.eq.s32.totalorder %s105, 0
      %s108 = sadd.s32 %s107, 1
      %s109 = scalar_select %p106, %s107, %s108
      %p112 = pneg %p106
      %p113 = scmp.eq.s32.totalorder %s13, 1
      %p114 = por %p112, %p113
      %p115 = scmp.ne.s32.totalorder %s107, %s110
      %p116 = scmp.eq.s32.totalorder %s13, 0
      %p117 = por %p115, %p116
      %p118 = scmp.ne.s32.totalorder %s107, %s110
      %p119 = scmp.eq.s32.totalorder %s18, 1
      %p120 = por %p118, %p119
      %p121 = scmp.ne.s32.totalorder %s110, %s111
      %p122 = scmp.eq.s32.totalorder %s18, 0
      %p123 = por %p121, %p122
      %p124 = scmp.ne.s32.totalorder %s110, %s111
      %p125 = scmp.eq.s32.totalorder %s19, 1
      %p126 = por %p124, %p125
      %p128 = scmp.ne.s32.totalorder %s111, %s127
      %p129 = scmp.eq.s32.totalorder %s19, 0
      %p130 = por %p128, %p129
      %p131 = scmp.le.s32.totalorder 1, %s13
      %p132 = scmp.lt.s32.totalorder %s13, 3
      %p133 = pnand %p131, %p132
      %p134 = pneg %p133
      // Predicated region
      $region9: #{tpu_custom_call.1} parent=5 // pred_check
        _
      $region10: #{tpu_custom_call.1} parent=5 // pred_check_branch
        %136 = sbr.rel (%p133) target = $region12
      $region11: #{tpu_custom_call.1} parent=5 // pred_region
        %s137 = ssub.s32 %s13, 1
        // Predicated region
        $region13: #{tpu_custom_call.1} parent=11 // pred_check
          %p138 = pneg %p74
        $region14: #{tpu_custom_call.1} parent=11 // pred_check_branch
          %140 = sbr.rel (%p138) target = $region16
        $region15: #{tpu_custom_call.1} parent=11 // pred_region
          %s142 = ssub.s32 64, 64
          %143 = vsyncadd [#allocation5], %s142
          %s145 = sshll.u32 [#allocation4], 4
          %s146 = int_to_ptr.vmem [resolvable:$true] %s145
          %148 = dma.hbm_to_vmem [thread:$0]  %s1, 64, %s146, [#allocation5]
        $region16: #{tpu_custom_call.1} parent=11 // pred_fallthru
          _
        // Predicated region
        $region17: #{tpu_custom_call.1} parent=11 // pred_check
          %p149 = pneg %p95
        $region18: #{tpu_custom_call.1} parent=11 // pred_check_branch
          %151 = sbr.rel (%p149) target = $region20
        $region19: #{tpu_custom_call.1} parent=11 // pred_region
          _
        $region20: #{tpu_custom_call.1} parent=11 // pred_fallthru
          _
      $region12: #{tpu_custom_call.1} parent=5 // pred_fallthru
        _
      %p152 = scmp.lt.s32.totalorder %s13, 2
      // Predicated region
      $region21: #{tpu_custom_call.1} parent=5 // pred_check
        %p153 = pneg %p152
      $region22: #{tpu_custom_call.1} parent=5 // pred_check_branch
        %155 = sbr.rel (%p153) target = $region24
      $region23: #{tpu_custom_call.1} parent=5 // pred_region
        // Predicated region
        $region25: #{tpu_custom_call.1} parent=23 // pred_check
          %p156 = pneg %p47
        $region26: #{tpu_custom_call.1} parent=23 // pred_check_branch
          %158 = sbr.rel (%p156) target = $region28
        $region27: #{tpu_custom_call.1} parent=23 // pred_region
          %s159 = sand.u32 %s37, 1
          %s160 = scalar_lea.sflag [#allocation3], %s159
          %s161 = sand.u32 %s37, 1
          %s162 = smul.addr %s161, 16
          %s163 = scalar_lea.vmem [#allocation2], %s162
          %s164 = smul.u32 2, %s21
          %s166 = ssub.s32 256, 256
          %167 = vsyncadd %s160, %s166
          %s168 = smul.addr %s20, 2
          %s169 = sadd.s32 %s164, %s168
          %s170 = smul.addr %s169, 128
          %s171 = scalar_lea.hbm %s0, %s170
          %s173 = sshll.u32 %s163, 4
          %s174 = int_to_ptr.vmem [resolvable:$true] %s173
          %176 = dma.hbm_to_vmem [thread:$0]  %s171, 256, %s174, %s160
        $region28: #{tpu_custom_call.1} parent=23 // pred_fallthru
          _
      $region24: #{tpu_custom_call.1} parent=5 // pred_fallthru
        _
      %p177 = scmp.le.s32.totalorder 1, %s13
      %p178 = scmp.lt.s32.totalorder %s13, 3
      %p179 = pnand %p177, %p178
      %p180 = pneg %p179
      // Predicated region
      $region29: #{tpu_custom_call.1} parent=5 // pred_check
        _
      $region30: #{tpu_custom_call.1} parent=5 // pred_check_branch
        %182 = sbr.rel (%p179) target = $region32
      $region31: #{tpu_custom_call.1} parent=5 // pred_region
        %s183 = ssub.s32 %s13, 1
        %s184 = sand.u32 %s40, 1
        %s185 = scalar_lea.sflag [#allocation3], %s184
        %s186 = sand.u32 %s40, 1
        %s187 = smul.addr %s186, 16
        %s188 = scalar_lea.vmem [#allocation2], %s187
        // Predicated region
        $region33: #{tpu_custom_call.1} parent=31 // pred_check
          %p189 = pneg %p53
        $region34: #{tpu_custom_call.1} parent=31 // pred_check_branch
          %191 = sbr.rel (%p189) target = $region36
        $region35: #{tpu_custom_call.1} parent=31 // pred_region
          %192 = dma.done %s185, 256
        $region36: #{tpu_custom_call.1} parent=31 // pred_fallthru
          _
        // Predicated region
        $region37: #{tpu_custom_call.1} parent=31 // pred_check
          %p193 = pneg %p74
        $region38: #{tpu_custom_call.1} parent=31 // pred_check_branch
          %195 = sbr.rel (%p193) target = $region40
        $region39: #{tpu_custom_call.1} parent=31 // pred_region
          %196 = dma.done [#allocation5], 64
        $region40: #{tpu_custom_call.1} parent=31 // pred_fallthru
          _
        %s197 = sand.u32 %s40, 1
        %s198 = scalar_lea.sflag [#allocation3], %s197
        %s199 = sand.u32 %s40, 1
        %s200 = smul.addr %s199, 16
        %s201 = scalar_lea.vmem [#allocation2], %s200
        %p202 = pneg %p53
        %p203 = pneg %p50
        %p204 = pneg %p74
        %p205 = pneg %p71
        %p206 = pneg %p95
        %p207 = pneg %p92
        %p208 = pneg %p123
        %p209 = pneg %p120
        %s210 = smul.u32 32, %s23
        %p211 = scmp.lt.s32.totalorder %s22, 1
        %s212 = scalar_select %p211, %s22, 1
        %p213 = scmp.lt.s32.totalorder %s210, 31
        %s214 = scalar_select %p213, %s210, 31
        %s215 = smul.addr %s212, 32
        %s216 = sadd.s32 %s214, %s215
        %s217 = smul.addr %s216, 4
        %s218 = scalar_lea.vmem %s3, %s217
        %s219 = smul.u32 2, %s23
        %s220 = smul.u32 32, %s23
        %p221 = scmp.lt.s32.totalorder %s22, 1
        %s222 = scalar_select %p221, %s22, 1
        %p223 = scmp.lt.s32.totalorder %s220, 31
        %s224 = scalar_select %p223, %s220, 31
        %s225 = smul.addr %s222, 32
        %s226 = sadd.s32 %s224, %s225
        %s227 = smul.addr %s226, 4
        %s228 = scalar_lea.vmem %s3, %s227
        %s229 = smul.u32 32, %s23
        %v231 = vld [vmem:[#allocation4] sm:$0xf]
        %v232 = vld [vmem:[%s2] sm:$0x1]
        %v233 = vunpack.c.l.bf16 %v232
        %v234 = vld [vmem:[%s188] sm:$0xff]
        %v235 = vld [vmem:[%s188 + $0x8] sm:$0xff]
        %v236 = vpack.c.bf16 %v234, %v234
        %v237 = vpack.c.bf16 %v235, %v235
        %v238 = vlaneseq
        %v239 = vshrl.u32 %v238, 7
        %v240 = vsub.s32 0, %v239
        %v241 = vrot.slane %v233, %v240
        %242 = vxpose.xlu0.c.b16.start [1/8] %v236, 128
        %243 = vxpose.xlu0.c.b16.cont [2/8] 0, 128
        %244 = vxpose.xlu0.c.b16.cont [3/8] 0, 128
        %245 = vxpose.xlu0.c.b16.cont [4/8] 0, 128
        %246 = vxpose.xlu0.c.b16.cont [5/8] 0, 128
        %247 = vxpose.xlu0.c.b16.cont [6/8] 0, 128
        %248 = vxpose.xlu0.c.b16.cont [7/8] 0, 128
        %249 = vxpose.xlu0.c.b16.end [8/8] 0, 128
        %v250 = vpop.trf.xlu0
        %v251 = vpop.trf.xlu0
        %v252 = vpop.trf.xlu0
        %v253 = vpop.trf.xlu0
        %v254 = vpop.trf.xlu0
        %v255 = vpop.trf.xlu0
        %v256 = vpop.trf.xlu0
        %v257 = vpop.trf.xlu0
        %258 = vxpose.xlu0.c.b16.start [1/8] %v237, 128
        %259 = vxpose.xlu0.c.b16.cont [2/8] 0, 128
        %260 = vxpose.xlu0.c.b16.cont [3/8] 0, 128
        %261 = vxpose.xlu0.c.b16.cont [4/8] 0, 128
        %262 = vxpose.xlu0.c.b16.cont [5/8] 0, 128
        %263 = vxpose.xlu0.c.b16.cont [6/8] 0, 128
        %264 = vxpose.xlu0.c.b16.cont [7/8] 0, 128
        %265 = vxpose.xlu0.c.b16.end [8/8] 0, 128
        %v266 = vpop.trf.xlu0
        %v267 = vpop.trf.xlu0
        %v268 = vpop.trf.xlu0
        %v269 = vpop.trf.xlu0
        %v270 = vpop.trf.xlu0
        %v271 = vpop.trf.xlu0
        %v272 = vpop.trf.xlu0
        %v273 = vpop.trf.xlu0
        %vm274 = vcmask 64512
        %v276 = vsel %vm274, %v250, 0
        %v279 = vsel %vm274, %v251, 0
        %v282 = vsel %vm274, %v252, 0
        %v285 = vsel %vm274, %v253, 0
        %v288 = vsel %vm274, %v254, 0
        %v291 = vsel %vm274, %v255, 0
        %v294 = vsel %vm274, %v256, 0
        %v297 = vsel %vm274, %v257, 0
        %v300 = vsel %vm274, %v266, 0
        %v303 = vsel %vm274, %v267, 0
        %v306 = vsel %vm274, %v268, 0
        %v309 = vsel %vm274, %v269, 0
        %v312 = vsel %vm274, %v270, 0
        %v315 = vsel %vm274, %v271, 0
        %v318 = vsel %vm274, %v272, 0
        %v321 = vsel %vm274, %v273, 0
        %vm323 = vcmask 1043456
        %v325 = vsel %vm323, %v231, 0
        %327 = vmatprep.subr.bf16.mxu0 0
        %328 = vmatpush1.bf16.msra.mxu0 0
        %329 = vmatprep.subr.bf16.mxu0 0
        %330 = vmatpush1.bf16.msra.mxu0 0
        %331 = vmatprep.subr.bf16.mxu0 0
        %332 = vmatpush1.bf16.msra.mxu0 0
        %333 = vmatprep.subr.bf16.mxu0 0
        %334 = vmatpush1.bf16.msra.mxu0 0
        %335 = vmatprep.subr.bf16.mxu0 0
        %336 = vmatpush1.bf16.msra.mxu0 0
        %337 = vmatprep.subr.bf16.mxu0 0
        %338 = vmatpush1.bf16.msra.mxu0 0
        %339 = vmatprep.subr.bf16.mxu0 0
        %340 = vmatpush1.bf16.msra.mxu0 0
        %341 = vmatprep.subr.bf16.mxu0 0
        %342 = vmatpush1.bf16.msra.mxu0 %v325
        %343 = vmatprep.subr.bf16.mxu0 0
        %344 = vmatpush2.bf16.msra.mxu0 0
        %345 = vmatprep.subr.bf16.mxu0 0
        %346 = vmatpush2.bf16.msra.mxu0 0
        %347 = vmatprep.subr.bf16.mxu0 0
        %348 = vmatpush2.bf16.msra.mxu0 0
        %349 = vmatprep.subr.bf16.mxu0 0
        %350 = vmatpush2.bf16.msra.mxu0 0
        %351 = vmatprep.subr.bf16.mxu0 0
        %352 = vmatpush2.bf16.msra.mxu0 0
        %353 = vmatprep.subr.bf16.mxu0 0
        %354 = vmatpush2.bf16.msra.mxu0 0
        %355 = vmatprep.subr.bf16.mxu0 0
        %356 = vmatpush2.bf16.msra.mxu0 0
        %357 = vmatprep.subr.bf16.mxu0 0
        %358 = vmatpush2.bf16.msra.mxu0 0
        %359 = vmatprep.mubr.bf16.mxu0 0
        %360 = vmatmul.mubr.bf16.gmra.mxu0 %v276
        %v361 = vpop.f32.mrf.mxu0
        %v362 = vadd.f32 %v241, %v361
        %v363 = vpop.f32.mrf.mxu0
        %v364 = vpop.f32.mrf.mxu0
        %v365 = vadd.f32 %v241, %v364
        %v366 = vpop.f32.mrf.mxu0
        %367 = vmatprep.mubr.bf16.mxu0 0
        %368 = vmatmul.mubr.bf16.gmra.mxu0 %v279
        %v369 = vpop.f32.mrf.mxu0
        %v370 = vadd.f32 %v241, %v369
        %v371 = vpop.f32.mrf.mxu0
        %v372 = vpop.f32.mrf.mxu0
        %v373 = vadd.f32 %v241, %v372
        %v374 = vpop.f32.mrf.mxu0
        %375 = vmatprep.mubr.bf16.mxu0 0
        %376 = vmatmul.mubr.bf16.gmra.mxu0 %v282
        %v377 = vpop.f32.mrf.mxu0
        %v378 = vadd.f32 %v241, %v377
        %v379 = vpop.f32.mrf.mxu0
        %v380 = vpop.f32.mrf.mxu0
        %v381 = vadd.f32 %v241, %v380
        %v382 = vpop.f32.mrf.mxu0
        %383 = vmatprep.mubr.bf16.mxu0 0
        %384 = vmatmul.mubr.bf16.gmra.mxu0 %v285
        %v385 = vpop.f32.mrf.mxu0
        %v386 = vadd.f32 %v241, %v385
        %v387 = vpop.f32.mrf.mxu0
        %v388 = vpop.f32.mrf.mxu0
        %v389 = vadd.f32 %v241, %v388
        %v390 = vpop.f32.mrf.mxu0
        %391 = vmatprep.mubr.bf16.mxu0 0
        %392 = vmatmul.mubr.bf16.gmra.mxu0 %v288
        %v393 = vpop.f32.mrf.mxu0
        %v394 = vadd.f32 %v241, %v393
        %v395 = vpop.f32.mrf.mxu0
        %v396 = vpop.f32.mrf.mxu0
        %v397 = vadd.f32 %v241, %v396
        %v398 = vpop.f32.mrf.mxu0
        %399 = vmatprep.mubr.bf16.mxu0 0
        %400 = vmatmul.mubr.bf16.gmra.mxu0 %v291
        %v401 = vpop.f32.mrf.mxu0
        %v402 = vadd.f32 %v241, %v401
        %v403 = vpop.f32.mrf.mxu0
        %v404 = vpop.f32.mrf.mxu0
        %v405 = vadd.f32 %v241, %v404
        %v406 = vpop.f32.mrf.mxu0
        %407 = vmatprep.mubr.bf16.mxu0 0
        %408 = vmatmul.mubr.bf16.gmra.mxu0 %v294
        %v409 = vpop.f32.mrf.mxu0
        %v410 = vadd.f32 %v241, %v409
        %v411 = vpop.f32.mrf.mxu0
        %v412 = vpop.f32.mrf.mxu0
        %v413 = vadd.f32 %v241, %v412
        %v414 = vpop.f32.mrf.mxu0
        %415 = vmatprep.mubr.bf16.mxu0 0
        %416 = vmatmul.mubr.bf16.gmra.mxu0 %v297
        %v417 = vpop.f32.mrf.mxu0
        %v418 = vadd.f32 %v241, %v417
        %v419 = vpop.f32.mrf.mxu0
        %v420 = vpop.f32.mrf.mxu0
        %v421 = vadd.f32 %v241, %v420
        %v422 = vpop.f32.mrf.mxu0
        %423 = vmatprep.mubr.bf16.mxu0 0
        %424 = vmatmul.mubr.bf16.gmra.mxu0 %v300
        %v425 = vpop.f32.mrf.mxu0
        %v426 = vadd.f32 %v241, %v425
        %v427 = vpop.f32.mrf.mxu0
        %v428 = vpop.f32.mrf.mxu0
        %v429 = vadd.f32 %v241, %v428
        %v430 = vpop.f32.mrf.mxu0
        %431 = vmatprep.mubr.bf16.mxu0 0
        %432 = vmatmul.mubr.bf16.gmra.mxu0 %v303
        %v433 = vpop.f32.mrf.mxu0
        %v434 = vadd.f32 %v241, %v433
        %v435 = vpop.f32.mrf.mxu0
        %v436 = vpop.f32.mrf.mxu0
        %v437 = vadd.f32 %v241, %v436
        %v438 = vpop.f32.mrf.mxu0
        %439 = vmatprep.mubr.bf16.mxu0 0
        %440 = vmatmul.mubr.bf16.gmra.mxu0 %v306
        %v441 = vpop.f32.mrf.mxu0
        %v442 = vadd.f32 %v241, %v441
        %v443 = vpop.f32.mrf.mxu0
        %v444 = vpop.f32.mrf.mxu0
        %v445 = vadd.f32 %v241, %v444
        %v446 = vpop.f32.mrf.mxu0
        %447 = vmatprep.mubr.bf16.mxu0 0
        %448 = vmatmul.mubr.bf16.gmra.mxu0 %v309
        %v449 = vpop.f32.mrf.mxu0
        %v450 = vadd.f32 %v241, %v449
        %v451 = vpop.f32.mrf.mxu0
        %v452 = vpop.f32.mrf.mxu0
        %v453 = vadd.f32 %v241, %v452
        %v454 = vpop.f32.mrf.mxu0
        %455 = vmatprep.mubr.bf16.mxu0 0
        %456 = vmatmul.mubr.bf16.gmra.mxu0 %v312
        %v457 = vpop.f32.mrf.mxu0
        %v458 = vadd.f32 %v241, %v457
        %v459 = vpop.f32.mrf.mxu0
        %v460 = vpop.f32.mrf.mxu0
        %v461 = vadd.f32 %v241, %v460
        %v462 = vpop.f32.mrf.mxu0
        %463 = vmatprep.mubr.bf16.mxu0 0
        %464 = vmatmul.mubr.bf16.gmra.mxu0 %v315
        %v465 = vpop.f32.mrf.mxu0
        %v466 = vadd.f32 %v241, %v465
        %v467 = vpop.f32.mrf.mxu0
        %v468 = vpop.f32.mrf.mxu0
        %v469 = vadd.f32 %v241, %v468
        %v470 = vpop.f32.mrf.mxu0
        %471 = vmatprep.mubr.bf16.mxu0 0
        %472 = vmatmul.mubr.bf16.gmra.mxu0 %v318
        %v473 = vpop.f32.mrf.mxu0
        %v474 = vadd.f32 %v241, %v473
        %v475 = vpop.f32.mrf.mxu0
        %v476 = vpop.f32.mrf.mxu0
        %v477 = vadd.f32 %v241, %v476
        %v478 = vpop.f32.mrf.mxu0
        %479 = vmatprep.mubr.bf16.mxu0 0
        %480 = vmatmul.mubr.bf16.gmra.mxu0 %v321
        %v481 = vpop.f32.mrf.mxu0
        %v482 = vadd.f32 %v241, %v481
        %v483 = vpop.f32.mrf.mxu0
        %v484 = vpop.f32.mrf.mxu0
        %v485 = vadd.f32 %v241, %v484
        %v486 = vpop.f32.mrf.mxu0
        %487 = vdwg.mxu0
        %v488 = vpack.c.bf16 %v365, %v362
        %v489 = vpack.c.bf16 %v373, %v370
        %v490 = vpack.c.bf16 %v381, %v378
        %v491 = vpack.c.bf16 %v389, %v386
        %v492 = vpack.c.bf16 %v397, %v394
        %v493 = vpack.c.bf16 %v405, %v402
        %v494 = vpack.c.bf16 %v413, %v410
        %v495 = vpack.c.bf16 %v421, %v418
        %v496 = vpack.c.bf16 %v429, %v426
        %v497 = vpack.c.bf16 %v437, %v434
        %v498 = vpack.c.bf16 %v445, %v442
        %v499 = vpack.c.bf16 %v453, %v450
        %v500 = vpack.c.bf16 %v461, %v458
        %v501 = vpack.c.bf16 %v469, %v466
        %v502 = vpack.c.bf16 %v477, %v474
        %v503 = vpack.c.bf16 %v485, %v482
        %v520 = vunpack.c.l.b16 %v488
        %v521 = vunpack.c.h.b16 %v488
        %v522 = vunpack.c.l.b16 %v489
        %v523 = vunpack.c.h.b16 %v489
        %v524 = vunpack.c.l.b16 %v490
        %v525 = vunpack.c.h.b16 %v490
        %v526 = vunpack.c.l.b16 %v491
        %v527 = vunpack.c.h.b16 %v491
        %v528 = vunpack.c.l.b16 %v492
        %v529 = vunpack.c.h.b16 %v492
        %v530 = vunpack.c.l.b16 %v493
        %v531 = vunpack.c.h.b16 %v493
        %v532 = vunpack.c.l.b16 %v494
        %v533 = vunpack.c.h.b16 %v494
        %v534 = vunpack.c.l.b16 %v495
        %v535 = vunpack.c.h.b16 %v495
        %v536 = vunpack.c.l.b16 %v496
        %v537 = vunpack.c.h.b16 %v496
        %v538 = vunpack.c.l.b16 %v497
        %v539 = vunpack.c.h.b16 %v497
        %v540 = vunpack.c.l.b16 %v498
        %v541 = vunpack.c.h.b16 %v498
        %v542 = vunpack.c.l.b16 %v499
        %v543 = vunpack.c.h.b16 %v499
        %v544 = vunpack.c.l.b16 %v500
        %v545 = vunpack.c.h.b16 %v500
        %v546 = vunpack.c.l.b16 %v501
        %v547 = vunpack.c.h.b16 %v501
        %v548 = vunpack.c.l.b16 %v502
        %v549 = vunpack.c.h.b16 %v502
        %v550 = vunpack.c.l.b16 %v503
        %v551 = vunpack.c.h.b16 %v503
        %v552 = vpack.c.b16 %v520, %v520
        %v553 = vpack.c.b16 %v521, %v521
        %v554 = vpack.c.b16 %v522, %v522
        %v555 = vpack.c.b16 %v523, %v523
        %v556 = vpack.c.b16 %v524, %v524
        %v557 = vpack.c.b16 %v525, %v525
        %v558 = vpack.c.b16 %v526, %v526
        %v559 = vpack.c.b16 %v527, %v527
        %v560 = vpack.c.b16 %v528, %v528
        %v561 = vpack.c.b16 %v529, %v529
        %v562 = vpack.c.b16 %v530, %v530
        %v563 = vpack.c.b16 %v531, %v531
        %v564 = vpack.c.b16 %v532, %v532
        %v565 = vpack.c.b16 %v533, %v533
        %v566 = vpack.c.b16 %v534, %v534
        %v567 = vpack.c.b16 %v535, %v535
        %v568 = vpack.c.b16 %v536, %v536
        %v569 = vpack.c.b16 %v537, %v537
        %v570 = vpack.c.b16 %v538, %v538
        %v571 = vpack.c.b16 %v539, %v539
        %v572 = vpack.c.b16 %v540, %v540
        %v573 = vpack.c.b16 %v541, %v541
        %v574 = vpack.c.b16 %v542, %v542
        %v575 = vpack.c.b16 %v543, %v543
        %v576 = vpack.c.b16 %v544, %v544
        %v577 = vpack.c.b16 %v545, %v545
        %v578 = vpack.c.b16 %v546, %v546
        %v579 = vpack.c.b16 %v547, %v547
        %v580 = vpack.c.b16 %v548, %v548
        %v581 = vpack.c.b16 %v549, %v549
        %v582 = vpack.c.b16 %v550, %v550
        %v583 = vpack.c.b16 %v551, %v551
        %vm616 = vcmask 519168
        %617 = vst.msk [vmem:[%s228] sm:$0xf] %vm616, %v552
        %618 = vst.msk [vmem:[%s228 + $0x4] sm:$0xf] %vm616, %v553
        %619 = vst.msk [vmem:[%s228 + $0x8] sm:$0xf] %vm616, %v554
        %620 = vst.msk [vmem:[%s228 + $0xc] sm:$0xf] %vm616, %v555
        %621 = vst.msk [vmem:[%s228 + $0x10] sm:$0xf] %vm616, %v556
        %622 = vst.msk [vmem:[%s228 + $0x14] sm:$0xf] %vm616, %v557
        %623 = vst.msk [vmem:[%s228 + $0x18] sm:$0xf] %vm616, %v558
        %624 = vst.msk [vmem:[%s228 + $0x1c] sm:$0xf] %vm616, %v559
        %625 = vst.msk [vmem:[%s228 + $0x20] sm:$0xf] %vm616, %v560
        %626 = vst.msk [vmem:[%s228 + $0x24] sm:$0xf] %vm616, %v561
        %627 = vst.msk [vmem:[%s228 + $0x28] sm:$0xf] %vm616, %v562
        %628 = vst.msk [vmem:[%s228 + $0x2c] sm:$0xf] %vm616, %v563
        %629 = vst.msk [vmem:[%s228 + $0x30] sm:$0xf] %vm616, %v564
        %630 = vst.msk [vmem:[%s228 + $0x34] sm:$0xf] %vm616, %v565
        %631 = vst.msk [vmem:[%s228 + $0x38] sm:$0xf] %vm616, %v566
        %632 = vst.msk [vmem:[%s228 + $0x3c] sm:$0xf] %vm616, %v567
        %633 = vst.msk [vmem:[%s228 + $0x40] sm:$0xf] %vm616, %v568
        %634 = vst.msk [vmem:[%s228 + $0x44] sm:$0xf] %vm616, %v569
        %635 = vst.msk [vmem:[%s228 + $0x48] sm:$0xf] %vm616, %v570
        %636 = vst.msk [vmem:[%s228 + $0x4c] sm:$0xf] %vm616, %v571
        %637 = vst.msk [vmem:[%s228 + $0x50] sm:$0xf] %vm616, %v572
        %638 = vst.msk [vmem:[%s228 + $0x54] sm:$0xf] %vm616, %v573
        %639 = vst.msk [vmem:[%s228 + $0x58] sm:$0xf] %vm616, %v574
        %640 = vst.msk [vmem:[%s228 + $0x5c] sm:$0xf] %vm616, %v575
        %641 = vst.msk [vmem:[%s228 + $0x60] sm:$0xf] %vm616, %v576
        %642 = vst.msk [vmem:[%s228 + $0x64] sm:$0xf] %vm616, %v577
        %643 = vst.msk [vmem:[%s228 + $0x68] sm:$0xf] %vm616, %v578
        %644 = vst.msk [vmem:[%s228 + $0x6c] sm:$0xf] %vm616, %v579
        %645 = vst.msk [vmem:[%s228 + $0x70] sm:$0xf] %vm616, %v580
        %646 = vst.msk [vmem:[%s228 + $0x74] sm:$0xf] %vm616, %v581
        %647 = vst.msk [vmem:[%s228 + $0x78] sm:$0xf] %vm616, %v582
        %648 = vst.msk [vmem:[%s228 + $0x7c] sm:$0xf] %vm616, %v583
        %v649 = vxor.u32 %v362, 2147483648
        %v650 = vxor.u32 %v365, 2147483648
        %v651 = vxor.u32 %v370, 2147483648
        %v652 = vxor.u32 %v373, 2147483648
        %v653 = vxor.u32 %v378, 2147483648
        %v654 = vxor.u32 %v381, 2147483648
        %v655 = vxor.u32 %v386, 2147483648
        %v656 = vxor.u32 %v389, 2147483648
        %v657 = vxor.u32 %v394, 2147483648
        %v658 = vxor.u32 %v397, 2147483648
        %v659 = vxor.u32 %v402, 2147483648
        %v660 = vxor.u32 %v405, 2147483648
        %v661 = vxor.u32 %v410, 2147483648
        %v662 = vxor.u32 %v413, 2147483648
        %v663 = vxor.u32 %v418, 2147483648
        %v664 = vxor.u32 %v421, 2147483648
        %v665 = vxor.u32 %v426, 2147483648
        %v666 = vxor.u32 %v429, 2147483648
        %v667 = vxor.u32 %v434, 2147483648
        %v668 = vxor.u32 %v437, 2147483648
        %v669 = vxor.u32 %v442, 2147483648
        %v670 = vxor.u32 %v445, 2147483648
        %v671 = vxor.u32 %v450, 2147483648
        %v672 = vxor.u32 %v453, 2147483648
        %v673 = vxor.u32 %v458, 2147483648
        %v674 = vxor.u32 %v461, 2147483648
        %v675 = vxor.u32 %v466, 2147483648
        %v676 = vxor.u32 %v469, 2147483648
        %v677 = vxor.u32 %v474, 2147483648
        %v678 = vxor.u32 %v477, 2147483648
        %v679 = vxor.u32 %v482, 2147483648
        %v680 = vxor.u32 %v485, 2147483648
        %v681 = vmul.f32 %v649, 1.442695
        %v682 = vpow.pop %v681
        %v683 = vmul.f32 %v650, 1.442695
        %v684 = vpow.pop %v683
        %v685 = vmul.f32 %v651, 1.442695
        %v686 = vpow.pop %v685
        %v687 = vmul.f32 %v652, 1.442695
        %v688 = vpow.pop %v687
        %v689 = vmul.f32 %v653, 1.442695
        %v690 = vpow.pop %v689
        %v691 = vmul.f32 %v654, 1.442695
        %v692 = vpow.pop %v691
        %v693 = vmul.f32 %v655, 1.442695
        %v694 = vpow.pop %v693
        %v695 = vmul.f32 %v656, 1.442695
        %v696 = vpow.pop %v695
        %v697 = vmul.f32 %v657, 1.442695
        %v698 = vpow.pop %v697
        %v699 = vmul.f32 %v658, 1.442695
        %v700 = vpow.pop %v699
        %v701 = vmul.f32 %v659, 1.442695
        %v702 = vpow.pop %v701
        %v703 = vmul.f32 %v660, 1.442695
        %v704 = vpow.pop %v703
        %v705 = vmul.f32 %v661, 1.442695
        %v706 = vpow.pop %v705
        %v707 = vmul.f32 %v662, 1.442695
        %v708 = vpow.pop %v707
        %v709 = vmul.f32 %v663, 1.442695
        %v710 = vpow.pop %v709
        %v711 = vmul.f32 %v664, 1.442695
        %v712 = vpow.pop %v711
        %v713 = vmul.f32 %v665, 1.442695
        %v714 = vpow.pop %v713
        %v715 = vmul.f32 %v666, 1.442695
        %v716 = vpow.pop %v715
        %v717 = vmul.f32 %v667, 1.442695
        %v718 = vpow.pop %v717
        %v719 = vmul.f32 %v668, 1.442695
        %v720 = vpow.pop %v719
        %v721 = vmul.f32 %v669, 1.442695
        %v722 = vpow.pop %v721
        %v723 = vmul.f32 %v670, 1.442695
        %v724 = vpow.pop %v723
        %v725 = vmul.f32 %v671, 1.442695
        %v726 = vpow.pop %v725
        %v727 = vmul.f32 %v672, 1.442695
        %v728 = vpow.pop %v727
        %v729 = vmul.f32 %v673, 1.442695
        %v730 = vpow.pop %v729
        %v731 = vmul.f32 %v674, 1.442695
        %v732 = vpow.pop %v731
        %v733 = vmul.f32 %v675, 1.442695
        %v734 = vpow.pop %v733
        %v735 = vmul.f32 %v676, 1.442695
        %v736 = vpow.pop %v735
        %v737 = vmul.f32 %v677, 1.442695
        %v738 = vpow.pop %v737
        %v739 = vmul.f32 %v678, 1.442695
        %v740 = vpow.pop %v739
        %v741 = vmul.f32 %v679, 1.442695
        %v742 = vpow.pop %v741
        %v743 = vmul.f32 %v680, 1.442695
        %v744 = vpow.pop %v743
        %v745 = vadd.f32 %v682, 1.0
        %v746 = vadd.f32 %v684, 1.0
        %v747 = vadd.f32 %v686, 1.0
        %v748 = vadd.f32 %v688, 1.0
        %v749 = vadd.f32 %v690, 1.0
        %v750 = vadd.f32 %v692, 1.0
        %v751 = vadd.f32 %v694, 1.0
        %v752 = vadd.f32 %v696, 1.0
        %v753 = vadd.f32 %v698, 1.0
        %v754 = vadd.f32 %v700, 1.0
        %v755 = vadd.f32 %v702, 1.0
        %v756 = vadd.f32 %v704, 1.0
        %v757 = vadd.f32 %v706, 1.0
        %v758 = vadd.f32 %v708, 1.0
        %v759 = vadd.f32 %v710, 1.0
        %v760 = vadd.f32 %v712, 1.0
        %v761 = vadd.f32 %v714, 1.0
        %v762 = vadd.f32 %v716, 1.0
        %v763 = vadd.f32 %v718, 1.0
        %v764 = vadd.f32 %v720, 1.0
        %v765 = vadd.f32 %v722, 1.0
        %v766 = vadd.f32 %v724, 1.0
        %v767 = vadd.f32 %v726, 1.0
        %v768 = vadd.f32 %v728, 1.0
        %v769 = vadd.f32 %v730, 1.0
        %v770 = vadd.f32 %v732, 1.0
        %v771 = vadd.f32 %v734, 1.0
        %v772 = vadd.f32 %v736, 1.0
        %v773 = vadd.f32 %v738, 1.0
        %v774 = vadd.f32 %v740, 1.0
        %v775 = vadd.f32 %v742, 1.0
        %v776 = vadd.f32 %v744, 1.0
        %v777 = vrcp.pop %v745
        %v778 = vmul.f32 1.0, %v777
        %v779 = vrcp.pop %v746
        %v780 = vmul.f32 1.0, %v779
        %v781 = vrcp.pop %v747
        %v782 = vmul.f32 1.0, %v781
        %v783 = vrcp.pop %v748
        %v784 = vmul.f32 1.0, %v783
        %v785 = vrcp.pop %v749
        %v786 = vmul.f32 1.0, %v785
        %v787 = vrcp.pop %v750
        %v788 = vmul.f32 1.0, %v787
        %v789 = vrcp.pop %v751
        %v790 = vmul.f32 1.0, %v789
        %v791 = vrcp.pop %v752
        %v792 = vmul.f32 1.0, %v791
        %v793 = vrcp.pop %v753
        %v794 = vmul.f32 1.0, %v793
        %v795 = vrcp.pop %v754
        %v796 = vmul.f32 1.0, %v795
        %v797 = vrcp.pop %v755
        %v798 = vmul.f32 1.0, %v797
        %v799 = vrcp.pop %v756
        %v800 = vmul.f32 1.0, %v799
        %v801 = vrcp.pop %v757
        %v802 = vmul.f32 1.0, %v801
        %v803 = vrcp.pop %v758
        %v804 = vmul.f32 1.0, %v803
        %v805 = vrcp.pop %v759
        %v806 = vmul.f32 1.0, %v805
        %v807 = vrcp.pop %v760
        %v808 = vmul.f32 1.0, %v807
        %v809 = vrcp.pop %v761
        %v810 = vmul.f32 1.0, %v809
        %v811 = vrcp.pop %v762
        %v812 = vmul.f32 1.0, %v811
        %v813 = vrcp.pop %v763
        %v814 = vmul.f32 1.0, %v813
        %v815 = vrcp.pop %v764
        %v816 = vmul.f32 1.0, %v815
        %v817 = vrcp.pop %v765
        %v818 = vmul.f32 1.0, %v817
        %v819 = vrcp.pop %v766
        %v820 = vmul.f32 1.0, %v819
        %v821 = vrcp.pop %v767
        %v822 = vmul.f32 1.0, %v821
        %v823 = vrcp.pop %v768
        %v824 = vmul.f32 1.0, %v823
        %v825 = vrcp.pop %v769
        %v826 = vmul.f32 1.0, %v825
        %v827 = vrcp.pop %v770
        %v828 = vmul.f32 1.0, %v827
        %v829 = vrcp.pop %v771
        %v830 = vmul.f32 1.0, %v829
        %v831 = vrcp.pop %v772
        %v832 = vmul.f32 1.0, %v831
        %v833 = vrcp.pop %v773
        %v834 = vmul.f32 1.0, %v833
        %v835 = vrcp.pop %v774
        %v836 = vmul.f32 1.0, %v835
        %v837 = vrcp.pop %v775
        %v838 = vmul.f32 1.0, %v837
        %v839 = vrcp.pop %v776
        %v840 = vmul.f32 1.0, %v839
        %v841 = vpack.c.bf16 %v780, %v778
        %v842 = vpack.c.bf16 %v784, %v782
        %v843 = vpack.c.bf16 %v788, %v786
        %v844 = vpack.c.bf16 %v792, %v790
        %v845 = vpack.c.bf16 %v796, %v794
        %v846 = vpack.c.bf16 %v800, %v798
        %v847 = vpack.c.bf16 %v804, %v802
        %v848 = vpack.c.bf16 %v808, %v806
        %v849 = vpack.c.bf16 %v812, %v810
        %v850 = vpack.c.bf16 %v816, %v814
        %v851 = vpack.c.bf16 %v820, %v818
        %v852 = vpack.c.bf16 %v824, %v822
        %v853 = vpack.c.bf16 %v828, %v826
        %v854 = vpack.c.bf16 %v832, %v830
        %v855 = vpack.c.bf16 %v836, %v834
        %v856 = vpack.c.bf16 %v840, %v838
        %v873 = vunpack.c.l.b16 %v841
        %v874 = vunpack.c.h.b16 %v841
        %v875 = vunpack.c.l.b16 %v842
        %v876 = vunpack.c.h.b16 %v842
        %v877 = vunpack.c.l.b16 %v843
        %v878 = vunpack.c.h.b16 %v843
        %v879 = vunpack.c.l.b16 %v844
        %v880 = vunpack.c.h.b16 %v844
        %v881 = vunpack.c.l.b16 %v845
        %v882 = vunpack.c.h.b16 %v845
        %v883 = vunpack.c.l.b16 %v846
        %v884 = vunpack.c.h.b16 %v846
        %v885 = vunpack.c.l.b16 %v847
        %v886 = vunpack.c.h.b16 %v847
        %v887 = vunpack.c.l.b16 %v848
        %v888 = vunpack.c.h.b16 %v848
        %v889 = vunpack.c.l.b16 %v849
        %v890 = vunpack.c.h.b16 %v849
        %v891 = vunpack.c.l.b16 %v850
        %v892 = vunpack.c.h.b16 %v850
        %v893 = vunpack.c.l.b16 %v851
        %v894 = vunpack.c.h.b16 %v851
        %v895 = vunpack.c.l.b16 %v852
        %v896 = vunpack.c.h.b16 %v852
        %v897 = vunpack.c.l.b16 %v853
        %v898 = vunpack.c.h.b16 %v853
        %v899 = vunpack.c.l.b16 %v854
        %v900 = vunpack.c.h.b16 %v854
        %v901 = vunpack.c.l.b16 %v855
        %v902 = vunpack.c.h.b16 %v855
        %v903 = vunpack.c.l.b16 %v856
        %v904 = vunpack.c.h.b16 %v856
        %v905 = vpack.c.b16 %v873, %v873
        %v906 = vpack.c.b16 %v874, %v874
        %v907 = vpack.c.b16 %v875, %v875
        %v908 = vpack.c.b16 %v876, %v876
        %v909 = vpack.c.b16 %v877, %v877
        %v910 = vpack.c.b16 %v878, %v878
        %v911 = vpack.c.b16 %v879, %v879
        %v912 = vpack.c.b16 %v880, %v880
        %v913 = vpack.c.b16 %v881, %v881
        %v914 = vpack.c.b16 %v882, %v882
        %v915 = vpack.c.b16 %v883, %v883
        %v916 = vpack.c.b16 %v884, %v884
        %v917 = vpack.c.b16 %v885, %v885
        %v918 = vpack.c.b16 %v886, %v886
        %v919 = vpack.c.b16 %v887, %v887
        %v920 = vpack.c.b16 %v888, %v888
        %v921 = vpack.c.b16 %v889, %v889
        %v922 = vpack.c.b16 %v890, %v890
        %v923 = vpack.c.b16 %v891, %v891
        %v924 = vpack.c.b16 %v892, %v892
        %v925 = vpack.c.b16 %v893, %v893
        %v926 = vpack.c.b16 %v894, %v894
        %v927 = vpack.c.b16 %v895, %v895
        %v928 = vpack.c.b16 %v896, %v896
        %v929 = vpack.c.b16 %v897, %v897
        %v930 = vpack.c.b16 %v898, %v898
        %v931 = vpack.c.b16 %v899, %v899
        %v932 = vpack.c.b16 %v900, %v900
        %v933 = vpack.c.b16 %v901, %v901
        %v934 = vpack.c.b16 %v902, %v902
        %v935 = vpack.c.b16 %v903, %v903
        %v936 = vpack.c.b16 %v904, %v904
        %vm969 = vcmask 552448
        %970 = vst.msk [vmem:[%s228] sm:$0xf] %vm969, %v905
        %971 = vst.msk [vmem:[%s228 + $0x4] sm:$0xf] %vm969, %v906
        %972 = vst.msk [vmem:[%s228 + $0x8] sm:$0xf] %vm969, %v907
        %973 = vst.msk [vmem:[%s228 + $0xc] sm:$0xf] %vm969, %v908
        %974 = vst.msk [vmem:[%s228 + $0x10] sm:$0xf] %vm969, %v909
        %975 = vst.msk [vmem:[%s228 + $0x14] sm:$0xf] %vm969, %v910
        %976 = vst.msk [vmem:[%s228 + $0x18] sm:$0xf] %vm969, %v911
        %977 = vst.msk [vmem:[%s228 + $0x1c] sm:$0xf] %vm969, %v912
        %978 = vst.msk [vmem:[%s228 + $0x20] sm:$0xf] %vm969, %v913
        %979 = vst.msk [vmem:[%s228 + $0x24] sm:$0xf] %vm969, %v914
        %980 = vst.msk [vmem:[%s228 + $0x28] sm:$0xf] %vm969, %v915
        %981 = vst.msk [vmem:[%s228 + $0x2c] sm:$0xf] %vm969, %v916
        %982 = vst.msk [vmem:[%s228 + $0x30] sm:$0xf] %vm969, %v917
        %983 = vst.msk [vmem:[%s228 + $0x34] sm:$0xf] %vm969, %v918
        %984 = vst.msk [vmem:[%s228 + $0x38] sm:$0xf] %vm969, %v919
        %985 = vst.msk [vmem:[%s228 + $0x3c] sm:$0xf] %vm969, %v920
        %986 = vst.msk [vmem:[%s228 + $0x40] sm:$0xf] %vm969, %v921
        %987 = vst.msk [vmem:[%s228 + $0x44] sm:$0xf] %vm969, %v922
        %988 = vst.msk [vmem:[%s228 + $0x48] sm:$0xf] %vm969, %v923
        %989 = vst.msk [vmem:[%s228 + $0x4c] sm:$0xf] %vm969, %v924
        %990 = vst.msk [vmem:[%s228 + $0x50] sm:$0xf] %vm969, %v925
        %991 = vst.msk [vmem:[%s228 + $0x54] sm:$0xf] %vm969, %v926
        %992 = vst.msk [vmem:[%s228 + $0x58] sm:$0xf] %vm969, %v927
        %993 = vst.msk [vmem:[%s228 + $0x5c] sm:$0xf] %vm969, %v928
        %994 = vst.msk [vmem:[%s228 + $0x60] sm:$0xf] %vm969, %v929
        %995 = vst.msk [vmem:[%s228 + $0x64] sm:$0xf] %vm969, %v930
        %996 = vst.msk [vmem:[%s228 + $0x68] sm:$0xf] %vm969, %v931
        %997 = vst.msk [vmem:[%s228 + $0x6c] sm:$0xf] %vm969, %v932
        %998 = vst.msk [vmem:[%s228 + $0x70] sm:$0xf] %vm969, %v933
        %999 = vst.msk [vmem:[%s228 + $0x74] sm:$0xf] %vm969, %v934
        %1000 = vst.msk [vmem:[%s228 + $0x78] sm:$0xf] %vm969, %v935
        %1001 = vst.msk [vmem:[%s228 + $0x7c] sm:$0xf] %vm969, %v936
        %s1002 = smul.u32 32, %s23
        %p1003 = scmp.lt.s32.totalorder %s22, 1
        %s1004 = scalar_select %p1003, %s22, 1
        %p1005 = scmp.lt.s32.totalorder %s1002, 31
        %s1006 = scalar_select %p1005, %s1002, 31
        %s1007 = smul.addr %s1004, 32
        %s1008 = sadd.s32 %s1006, %s1007
        %s1009 = smul.addr %s1008, 4
        %s1010 = scalar_lea.vmem %s3, %s1009
        // Predicated region
        $region41: #{tpu_custom_call.1} parent=31 // pred_check
          %p1011 = pneg %p120
        $region42: #{tpu_custom_call.1} parent=31 // pred_check_branch
          %1013 = sbr.rel (%p1011) target = $region44
        $region43: #{tpu_custom_call.1} parent=31 // pred_region
          %s1014 = smul.u32 32, %s23
        $region44: #{tpu_custom_call.1} parent=31 // pred_fallthru
          _
      $region32: #{tpu_custom_call.1} parent=5 // pred_fallthru
        _
      %p1015 = scmp.le.s32.totalorder 2, %s13
      // Predicated region
      $region45: #{tpu_custom_call.1} parent=5 // pred_check
        %p1016 = pneg %p1015
      $region46: #{tpu_custom_call.1} parent=5 // pred_check_branch
        %1018 = sbr.rel (%p1016) target = $region48
      $region47: #{tpu_custom_call.1} parent=5 // pred_region
        %s1019 = ssub.s32 %s13, 2
        // Predicated region
        $region49: #{tpu_custom_call.1} parent=47 // pred_check
          %p1020 = pneg %p126
        $region50: #{tpu_custom_call.1} parent=47 // pred_check_branch
          %1022 = sbr.rel (%p1020) target = $region52
        $region51: #{tpu_custom_call.1} parent=47 // pred_region
          %s1023 = smul.u32 32, %s25
          %p1024 = scmp.lt.s32.totalorder %s24, 1
          %s1025 = scalar_select %p1024, %s24, 1
          %p1026 = scmp.lt.s32.totalorder %s1023, 31
          %s1027 = scalar_select %p1026, %s1023, 31
          %s1028 = smul.addr %s1025, 32
          %s1029 = sadd.s32 %s1027, %s1028
          %s1030 = smul.addr %s1029, 4
          %s1031 = scalar_lea.vmem %s3, %s1030
        $region52: #{tpu_custom_call.1} parent=47 // pred_fallthru
          _
      $region48: #{tpu_custom_call.1} parent=5 // pred_fallthru
        _
    $region6: #{tpu_custom_call.1} parent=1 // loop_footer
      %s17 = sadd.s32 1, %s13
    $region7: #{tpu_custom_call.1} parent=1 // loop_footer_branch
      %12 = sbr.rel target = $region3
    $region8: #{tpu_custom_call.1} parent=1 // loop_exit
      _
    %1032 = vsyncpa [#allocation3], 1
    %s1033 = scalar_lea.sflag [#allocation3], 1
    %1034 = vsyncpa %s1033, 1
    %1035 = vsyncpa [#allocation5], 1

</llo_original>
